<compile_context>
chip_gen: v5e
topology: v5e:2x2
jax: 0.10.0
libtpu: 0.0.40
codegen_flags: <defaults>
</compile_context>

<pallas_src>
import functools

import jax
import jax.numpy as jnp
from jax.experimental import pallas as pl
from jax.experimental.pallas import tpu as pltpu


def _round_up(x, m):
    return ((x + m - 1) // m) * m


def _pick_tiling(n):
    """Return (n_pad, tm, tk) so tiles divide n_pad, are >=128 (lane-dense)
    and int8 A blocks respect the packed (32, 128) tiling."""
    if n <= 1024:
        n_pad = _round_up(n, 128)
        return n_pad, n_pad, n_pad
    n_pad = _round_up(n, 1024)
    return n_pad, 1024, 1024


def _vmem_limit_bytes(need_bytes):
    """Generation-aware VMEM request: what the chosen tiles need plus margin
    for the compiler's own double-buffers/scratch, capped at 3/4 of physical
    capacity (important on v7x where physical VMEM per TC is only 64 MiB)."""
    try:
        phys = int(pltpu.get_tpu_info().vmem_capacity_bytes)
    except Exception:  # older jax / info unavailable: assume smallest (v7x)
        phys = 64 * 1024 * 1024
    cap = (phys * 3) // 4
    want = int(need_bytes * 1.5) + (8 << 20)
    return int(min(max(want, 32 << 20), cap))


def _block_spec(shape, index_map, buffers=None):
    """BlockSpec with optional N-deep buffering; graceful fallback if the
    installed jax does not accept pipeline_mode / pl.Buffered."""
    if buffers is not None:
        try:
            return pl.BlockSpec(shape, index_map,
                                pipeline_mode=pl.Buffered(buffers))
        except Exception:
            pass
    return pl.BlockSpec(shape, index_map)


# ---------------------------------------------------------------------------
# Kernel 1: hoisted per-relation feature transform  H[r] = X @ W_rel[r]
# (stored bf16 so the big aggregation matmul runs at bf16 MXU rate)
# ---------------------------------------------------------------------------
def _xw_kernel(x_ref, w_ref, h_ref):
    h_ref[0] = jnp.dot(
        x_ref[...], w_ref[0], preferred_element_type=jnp.float32
    ).astype(h_ref.dtype)


def relation_transforms(x, w_rel, tm):
    """Grid = (dst_tiles, relations): dst tile OUTERMOST so each X tile is
    fetched once and only the tiny W_rel[r] block changes per step."""
    num_rel, f_in, f_out = w_rel.shape
    n_pad = x.shape[0]
    ni = n_pad // tm
    need = 2 * tm * f_in * 4 + 2 * f_in * f_out * 4 + 2 * tm * f_out * 2
    return pl.pallas_call(
        _xw_kernel,
        out_shape=jax.ShapeDtypeStruct((num_rel, n_pad, f_out), jnp.bfloat16),
        grid_spec=pltpu.PrefetchScalarGridSpec(
            num_scalar_prefetch=0,
            grid=(ni, num_rel),
            in_specs=[
                pl.BlockSpec((tm, f_in), lambda i, r: (i, 0)),
                pl.BlockSpec((1, f_in, f_out), lambda i, r: (r, 0, 0)),
            ],
            out_specs=pl.BlockSpec((1, tm, f_out), lambda i, r: (r, i, 0)),
        ),
        compiler_params=pltpu.CompilerParams(
            dimension_semantics=("parallel", "arbitrary"),
            vmem_limit_bytes=_vmem_limit_bytes(need),
        ),
    )(x, w_rel)


# ---------------------------------------------------------------------------
# Kernel 2: tiled relational aggregation + epilogue
#   out[i] = X[i] @ W_root + b + sum_r scale[r,i] * sum_s A01[r,i,s] @ H[r,s]
# grid = (dst_tiles, R, src_tiles); the output block is revisited across (r,s).
# ---------------------------------------------------------------------------
def _rgcn_agg_kernel(x_ref, a_ref, scale_ref, h_ref, wroot_ref, b_ref, o_ref,
                     *, activation, valid_cols, h_resident, ns):
    # CORRECTNESS NOTE: accumulation goes directly into the VMEM-resident
    # output block.  This relies on grid order (i, r, s), the output index_map
    # depending only on i, and (r, s) marked "arbitrary", so the (r==0, s==0)
    # init is the first visit of each dst tile and revisits are consecutive.
    # Do NOT reorder the grid or mark r/s as "parallel".
    r = pl.program_id(1)
    s = pl.program_id(2)
    last_r = pl.num_programs(1) - 1
    last_s = pl.num_programs(2) - 1

    @pl.when((r == 0) & (s == 0))
    def _():
        o_ref[...] = (
            jnp.dot(x_ref[...], wroot_ref[...],
                    preferred_element_type=jnp.float32)
            + b_ref[...]
        )

    if h_resident:
        h_tile = h_ref[r * ns + s]          # [tk, f_out], VMEM-resident H
    else:
        h_tile = h_ref[0]                   # per-(r, s) pipelined tile

    # int8 edge counts upcast to bf16 in VMEM (VPU cost hidden under the
    # matmul); exact per-(relation, dst-row) 1/deg scale applied to the f32
    # partial product before accumulation.
    part = jnp.dot(a_ref[0].astype(jnp.bfloat16), h_tile,
                   preferred_element_type=jnp.float32)
    o_ref[...] += scale_ref[0] * part

    @pl.when((r == last_r) & (s == last_s))
    def _():
        z = o_ref[...]
        if activation == "relu":
            o_ref[...] = jnp.maximum(z, 0.0)
        elif activation == "log_softmax":
            col = jax.lax.broadcasted_iota(jnp.int32, z.shape, 1)
            mask = col < valid_cols          # exclude zero-padded lanes
            m = jnp.max(jnp.where(mask, z, -jnp.inf), axis=1, keepdims=True)
            se = jnp.sum(jnp.where(mask, jnp.exp(z - m), 0.0),
                         axis=1, keepdims=True)
            o_ref[...] = z - (jnp.log(se) + m)
        # else: identity


def rgcn_layer(x, a_i8, scale, w_rel, w_root, bias, tm, tk, *, activation,
               valid_cols=None):
    num_rel, n_pad, _ = a_i8.shape
    f_in = x.shape[1]
    f_out = w_root.shape[1]
    if valid_cols is None:
        valid_cols = f_out

    h = relation_transforms(x, w_rel, tm)             # [R, n_pad, f_out] bf16

    ni = n_pad // tm
    ns = n_pad // tk
    h = h.reshape(num_rel * ns, tk, f_out)            # contiguous -> free

    # Hold H fully VMEM-resident (constant-index full-array block -> DMA'd
    # once) whenever its pipeline buffers fit comfortably; this removes the
    # per-dst-tile H re-read stream entirely.
    h_bytes = num_rel * n_pad * f_out * 2
    h_resident = 2 * h_bytes <= (16 << 20)
    if h_resident:
        h_spec = pl.BlockSpec((num_rel * ns, tk, f_out),
                              lambda i, r, s: (0, 0, 0))
    else:
        h_spec = pl.BlockSpec((1, tk, f_out),
                              lambda i, r, s: (r * ns + s, 0, 0))

    # A is the binding HBM stream -> request 3-deep buffering on its DMA.
    a_spec = _block_spec((1, tm, tk), lambda i, r, s: (r, i, s), buffers=3)

    kernel = functools.partial(_rgcn_agg_kernel, activation=activation,
                               valid_cols=valid_cols, h_resident=h_resident,
                               ns=ns)

    need = (3 * tm * tk                                  # A (int8, 3 buffers)
            + tm * tk * 2                                # in-kernel bf16 upcast
            + (2 * h_bytes if h_resident else 2 * tk * f_out * 2)
            + 2 * tm * f_in * 4                          # X
            + 2 * tm * 4                                 # scale
            + 2 * f_in * f_out * 4 + 2 * f_out * 4       # weights / bias
            + 2 * tm * f_out * 4)                        # output block

    return pl.pallas_call(
        kernel,
        out_shape=jax.ShapeDtypeStruct((n_pad, f_out), jnp.float32),
        grid_spec=pltpu.PrefetchScalarGridSpec(
            num_scalar_prefetch=0,
            grid=(ni, num_rel, ns),
            in_specs=[
                pl.BlockSpec((tm, f_in), lambda i, r, s: (i, 0)),
                a_spec,
                pl.BlockSpec((1, tm, 1), lambda i, r, s: (r, i, 0)),
                h_spec,
                pl.BlockSpec((f_in, f_out), lambda i, r, s: (0, 0)),
                pl.BlockSpec((1, f_out), lambda i, r, s: (0, 0)),
            ],
            # Must stay independent of (r, s): accumulation into the resident
            # output block needs consecutive revisits per dst tile.
            out_specs=pl.BlockSpec((tm, f_out), lambda i, r, s: (i, 0)),
        ),
        compiler_params=pltpu.CompilerParams(
            dimension_semantics=("parallel", "arbitrary", "arbitrary"),
            vmem_limit_bytes=_vmem_limit_bytes(need),
        ),
    )(x, a_i8, scale, h, w_root, bias)


# ---------------------------------------------------------------------------
# Glue (scatter-based adjacency build, zero padding) — not the hot path.
# ---------------------------------------------------------------------------
def build_adjacency(edge_index, edge_type, num_nodes, num_relations,
                    n_pad=None):
    """Factored normalized adjacency:
         counts[r, dst, src] = #edges of type r   (int8, exact small ints)
         scale[r, dst, 0]    = 1 / max(deg_r(dst), 1)   (float32, exact)
    so A_norm = counts * scale with no bf16 rounding of 1/deg and a 1-byte
    binding HBM stream.  (Assumes < 128 duplicate edges per (r, dst, src).)"""
    if n_pad is None:
        n_pad = num_nodes
    src, dst = edge_index[0], edge_index[1]
    counts = jnp.zeros((num_relations, n_pad, n_pad), jnp.float32)
    counts = counts.at[edge_type, dst, src].add(1.0)
    deg = jnp.sum(counts, axis=2, keepdims=True)
    scale = 1.0 / jnp.maximum(deg, 1.0)               # [R, n_pad, 1] float32
    return counts.astype(jnp.int8), scale


def _pad2(w, rows, cols):
    return jnp.zeros((rows, cols), w.dtype).at[:w.shape[0], :w.shape[1]].set(w)


def _pad3(w, rows, cols):
    return jnp.zeros((w.shape[0], rows, cols), w.dtype).at[
        :, :w.shape[1], :w.shape[2]].set(w)


class RGCNParams:
    def __init__(self, key, in_channels, out_channels, num_relations, hidden=16):
        k = jax.random.split(key, 6)
        s = 0.1
        self.w_rel1 = s * jax.random.normal(
            k[0], (num_relations, in_channels, hidden), jnp.float32)
        self.w_root1 = s * jax.random.normal(
            k[1], (in_channels, hidden), jnp.float32)
        self.b1 = s * jax.random.normal(k[2], (1, hidden), jnp.float32)
        self.w_rel2 = s * jax.random.normal(
            k[3], (num_relations, hidden, out_channels), jnp.float32)
        self.w_root2 = s * jax.random.normal(
            k[4], (hidden, out_channels), jnp.float32)
        self.b2 = s * jax.random.normal(k[5], (1, out_channels), jnp.float32)


def rgcn_forward(params, x, edge_index, edge_type, num_relations):
    n, in_c = x.shape
    hidden = params.w_root1.shape[1]
    out_c = params.w_root2.shape[1]

    n_pad, tm, tk = _pick_tiling(n)
    hp = _round_up(hidden, 128)   # lane-dense hidden width
    op = _round_up(out_c, 128)    # lane-dense output width

    a_i8, scale = build_adjacency(edge_index, edge_type, n, num_relations,
                                  n_pad=n_pad)
    xp = jnp.zeros((n_pad, in_c), jnp.float32).at[:n].set(x)

    w_rel1 = _pad3(params.w_rel1, in_c, hp)
    w_root1 = _pad2(params.w_root1, in_c, hp)
    b1 = _pad2(params.b1, 1, hp)
    w_rel2 = _pad3(params.w_rel2, hp, op)
    w_root2 = _pad2(params.w_root2, hp, op)
    b2 = _pad2(params.b2, 1, op)

    h = rgcn_layer(xp, a_i8, scale, w_rel1, w_root1, b1, tm, tk,
                   activation="relu")
    z = rgcn_layer(h, a_i8, scale, w_rel2, w_root2, b2, tm, tk,
                   activation="log_softmax", valid_cols=out_c)
    return z[:n, :out_c]


def rgcn_reference(params, x, a_norm):
    """Pure-JAX f32 reference of the same forward pass."""
    def conv(xx, w_rel, w_root, b):
        msg = jnp.einsum("rij,jf->rif", a_norm, xx)
        agg = jnp.einsum("rif,rfo->io", msg, w_rel)
        return agg + xx @ w_root + b
    h = jax.nn.relu(conv(x, params.w_rel1, params.w_root1, params.b1))
    z = conv(h, params.w_rel2, params.w_root2, params.b2)
    return jax.nn.log_softmax(z, axis=1)


if __name__ == "__main__":
    key = jax.random.PRNGKey(0)
    N, IN_C, OUT_C, R, E = 16, 8, 4, 3, 40

    k_x, k_src, k_dst, k_et, k_p = jax.random.split(key, 5)
    x = jax.random.normal(k_x, (N, IN_C), jnp.float32)
    src = jax.random.randint(k_src, (E,), 0, N)
    dst = jax.random.randint(k_dst, (E,), 0, N)
    edge_index = jnp.stack([src, dst], axis=0)           # [2, E]
    edge_type = jax.random.randint(k_et, (E,), 0, R)     # [E]

    params = RGCNParams(k_p, IN_C, OUT_C, R, hidden=16)

    out = rgcn_forward(params, x, edge_index, edge_type, R)
    jax.block_until_ready(out)

    assert out.shape == (N, OUT_C)
    # rows are valid log-probabilities
    assert bool(jnp.allclose(jnp.sum(jnp.exp(out), axis=1), 1.0, atol=1e-3))
    # matches the pure-JAX f32 reference (only bf16 H storage rounding remains)
    counts_r, scale_r = build_adjacency(edge_index, edge_type, N, R)
    a_norm = counts_r.astype(jnp.float32) * scale_r
    ref = rgcn_reference(params, x, a_norm)
    assert bool(jnp.allclose(out, ref, atol=5e-2, rtol=5e-2))
    print("KERNEL_OK")
</pallas_src>

<mosaic_0001>
module attributes {stable_mosaic.version = 11 : i64} {
  func.func @_xw_kernel(%arg0: i32, %arg1: i32, %arg2: memref<128x8xf32, #tpu.memory_space<vmem>>, %arg3: memref<1x8x128xf32, #tpu.memory_space<vmem>>, %arg4: memref<1x128x128xbf16, #tpu.memory_space<vmem>>) attributes {dimension_semantics = [#tpu.dimension_semantics<parallel>, #tpu.dimension_semantics<arbitrary>], iteration_bounds = array<i64: 1, 3>, scalar_prefetch = 0 : i64, scratch_operands = 0 : i64, tpu.core_type = #tpu.core_type<tc>, window_params = [{transform_indices = @transform_0, window_bounds = array<i64: 128, 8>}, {transform_indices = @transform_1, window_bounds = array<i64: 1, 8, 128>}, {transform_indices = @transform_2, window_bounds = array<i64: 1, 128, 128>}]} {
    %c0 = arith.constant 0 : index
    %c0_0 = arith.constant 0 : index
    %0 = vector.load %arg2[%c0, %c0_0] : memref<128x8xf32, #tpu.memory_space<vmem>>, vector<128x8xf32>
    %c0_1 = arith.constant 0 : index
    %c0_2 = arith.constant 0 : index
    %c0_3 = arith.constant 0 : index
    %1 = vector.load %arg3[%c0_1, %c0_2, %c0_3] : memref<1x8x128xf32, #tpu.memory_space<vmem>>, vector<1x8x128xf32>
    %2 = vector.shape_cast %1 : vector<1x8x128xf32> to vector<8x128xf32>
    %cst = arith.constant dense<0.000000e+00> : vector<128x128xf32>
    %3 = tpu.matmul %0, %2, %cst {dimension_numbers = #tpu.dot_dimension_numbers<[1], [0], [0], [1], [0, 0, 1, 1], [], []>} : vector<128x8xf32>, vector<8x128xf32>, vector<128x128xf32> -> vector<128x128xf32>
    %4 = arith.truncf %3 : vector<128x128xf32> to vector<128x128xbf16>
    %c0_4 = arith.constant 0 : index
    %c0_5 = arith.constant 0 : index
    %c0_6 = arith.constant 0 : index
    %5 = vector.load %arg4[%c0_4, %c0_5, %c0_6] : memref<1x128x128xbf16, #tpu.memory_space<vmem>>, vector<1x128x128xbf16>
    %6 = vector.shape_cast %5 : vector<1x128x128xbf16> to vector<128x128xbf16>
    %7 = vector.shape_cast %4 : vector<128x128xbf16> to vector<1x128x128xbf16>
    tpu.vector_store %arg4[%c0_4, %c0_5, %c0_6], %7 {strides = array<i32>} : memref<1x128x128xbf16, #tpu.memory_space<vmem>>, vector<1x128x128xbf16>,
    return
  }
  func.func @transform_0(%arg0: i32, %arg1: i32) -> (i32, i32) {
    %c0_i32 = arith.constant 0 : i32
    %c0_i32_0 = arith.constant 0 : i32
    return %arg0, %c0_i32 : i32, i32
  }
  func.func @transform_1(%arg0: i32, %arg1: i32) -> (i32, i32, i32) {
    %c0_i32 = arith.constant 0 : i32
    %c0_i32_0 = arith.constant 0 : i32
    %c0_i32_1 = arith.constant 0 : i32
    return %arg1, %c0_i32, %c0_i32_0 : i32, i32, i32
  }
  func.func @transform_2(%arg0: i32, %arg1: i32) -> (i32, i32, i32) {
    %c0_i32 = arith.constant 0 : i32
    %c0_i32_0 = arith.constant 0 : i32
    return %arg1, %arg0, %c0_i32 : i32, i32, i32
  }
}

</mosaic_0001>

<llo_original>
// kernel: tpu_custom_call.1
$region0: #{tpu_custom_call.1}
  #allocation0 [shape = 'u32[]', space=smem, size = 0x4, offset = 0x4, fixed_abs, tag = 'smem constant byte address 0x4 - core index']
  #allocation1 [shape = 'u32[72,128]{1,0:T(1,128)}', space=vmem, size = 0x9000, scoped, tag = 'internal scratch']
  %s0 = inlined_call_operand.vmem [shape: f32[128,8], index: 0, kind: input, shape index: {}]
  %s1 = inlined_call_operand.vmem [shape: f32[3,8,128], index: 1, kind: input, shape index: {}]
  %s2 = inlined_call_operand.hbm [shape: bf16[3,128,128], index: 2, kind: output, shape index: {}]
  %s3 = sld [smem:[#allocation0]]
  $region41: #{tpu_custom_call.1} parent=0
    _
  %s5 = ssub.s32 1, %s3
  %s6 = scalar_select 0, %s5, %s3
  $region1: #{tpu_custom_call.1} parent=0
    #allocation2 [shape = 'u8[65536]{0}', space=vmem, size = 0x10000, scoped, tag = 'output window, operand 0']
    #allocation3 [shape = 's32[2]{0}', space=sflag, size = 0x8, scoped, tag = 'scoped memory for tpu_custom_call.1']
    %7 = vsyncpa [#allocation3], 0
    %s8 = scalar_lea.sflag [#allocation3], 1
    %9 = vsyncpa %s8, 0
    loop: start=0, step=1, limit=5
    $region2: #{tpu_custom_call.1} parent=1 // loop_pre_header
      _
    $region3: #{tpu_custom_call.1} parent=1 // loop_header
      %s11 = sphi 0, %s15
      %p12 = scmp.ge.s32.totalorder %s11, 5
      %s18 = sphi 0, %s30
      %s19 = sphi 0, %s26
      %s20 = sphi 0, %s18
      %s21 = sphi 0, %s19
      %s22 = sphi 0, %s20
      %s23 = sphi 0, %s21
      %s33 = sphi 0, %s35
      %s36 = sphi 0, %s33
      %s37 = sphi 0, %s36
      %s53 = sphi 0, %s37
      %s59 = sphi 0, %s61
      %s62 = sphi 0, %s59
      %s63 = sphi 0, %s62
      %s79 = sphi 0, %s63
      %s87 = sphi 0, %s89
      %s90 = sphi 0, %s87
      %s91 = sphi 0, %s90
      %s107 = sphi 0, %s91
    $region4: #{tpu_custom_call.1} parent=1 // loop_header_branch
      %14 = sbr.rel (%p12) target = $region8
    $region5: #{tpu_custom_call.1} parent=1 // loop_body
      %s16 = ssub.s32 %s11, 1
      %s17 = ssub.s32 %s11, 2
      %s24 = sadd.s32 1, %s19
      %p25 = scmp.ge.s32.totalorder %s24, 3
      %s26 = scalar_select %p25, 0, %s24
      %s27 = sadd.s32 1, %s18
      %s28 = scalar_select %p25, %s27, %s18
      %p29 = scmp.ge.s32.totalorder %s28, 1
      %s30 = scalar_select %p29, 0, %s28
      %s31 = ssub.s32 %s18, %s30
      %p32 = scmp.eq.s32.totalorder %s31, 0
      %s34 = sadd.s32 %s33, 1
      %s35 = scalar_select %p32, %s33, %s34
      %p38 = pneg %p32
      %p39 = scmp.eq.s32.totalorder %s11, 2
      %p40 = por %p38, %p39
      %p41 = scmp.ne.s32.totalorder %s33, %s36
      %p42 = scmp.eq.s32.totalorder %s11, 0
      %p43 = por %p41, %p42
      %p44 = scmp.ne.s32.totalorder %s33, %s36
      %p45 = scmp.eq.s32.totalorder %s16, 2
      %p46 = por %p44, %p45
      %p47 = scmp.ne.s32.totalorder %s36, %s37
      %p48 = scmp.eq.s32.totalorder %s16, 0
      %p49 = por %p47, %p48
      %p50 = scmp.ne.s32.totalorder %s36, %s37
      %p51 = scmp.eq.s32.totalorder %s17, 2
      %p52 = por %p50, %p51
      %p54 = scmp.ne.s32.totalorder %s37, %s53
      %p55 = scmp.eq.s32.totalorder %s17, 0
      %p56 = por %p54, %p55
      %s57 = ssub.s32 %s19, %s26
      %p58 = scmp.eq.s32.totalorder %s57, 0
      %s60 = sadd.s32 %s59, 1
      %s61 = scalar_select %p58, %s59, %s60
      %p64 = pneg %p58
      %p65 = scmp.eq.s32.totalorder %s11, 2
      %p66 = por %p64, %p65
      %p67 = scmp.ne.s32.totalorder %s59, %s62
      %p68 = scmp.eq.s32.totalorder %s11, 0
      %p69 = por %p67, %p68
      %p70 = scmp.ne.s32.totalorder %s59, %s62
      %p71 = scmp.eq.s32.totalorder %s16, 2
      %p72 = por %p70, %p71
      %p73 = scmp.ne.s32.totalorder %s62, %s63
      %p74 = scmp.eq.s32.totalorder %s16, 0
      %p75 = por %p73, %p74
      %p76 = scmp.ne.s32.totalorder %s62, %s63
      %p77 = scmp.eq.s32.totalorder %s17, 2
      %p78 = por %p76, %p77
      %p80 = scmp.ne.s32.totalorder %s63, %s79
      %p81 = scmp.eq.s32.totalorder %s17, 0
      %p82 = por %p80, %p81
      %s83 = ssub.s32 %s19, %s26
      %s84 = ssub.s32 %s18, %s30
      %s85 = sor.u32 %s83, %s84
      %p86 = scmp.eq.s32.totalorder %s85, 0
      %s88 = sadd.s32 %s87, 1
      %s89 = scalar_select %p86, %s87, %s88
      %p92 = pneg %p86
      %p93 = scmp.eq.s32.totalorder %s11, 2
      %p94 = por %p92, %p93
      %p95 = scmp.ne.s32.totalorder %s87, %s90
      %p96 = scmp.eq.s32.totalorder %s11, 0
      %p97 = por %p95, %p96
      %p98 = scmp.ne.s32.totalorder %s87, %s90
      %p99 = scmp.eq.s32.totalorder %s16, 2
      %p100 = por %p98, %p99
      %p101 = scmp.ne.s32.totalorder %s90, %s91
      %p102 = scmp.eq.s32.totalorder %s16, 0
      %p103 = por %p101, %p102
      %p104 = scmp.ne.s32.totalorder %s90, %s91
      %p105 = scmp.eq.s32.totalorder %s17, 2
      %p106 = por %p104, %p105
      %p108 = scmp.ne.s32.totalorder %s91, %s107
      %p109 = scmp.eq.s32.totalorder %s17, 0
      %p110 = por %p108, %p109
      %p111 = scmp.le.s32.totalorder 1, %s11
      %p112 = scmp.lt.s32.totalorder %s11, 4
      %p113 = pnand %p111, %p112
      %p114 = pneg %p113
      // Predicated region
      $region9: #{tpu_custom_call.1} parent=5 // pred_check
        _
      $region10: #{tpu_custom_call.1} parent=5 // pred_check_branch
        %116 = sbr.rel (%p113) target = $region12
      $region11: #{tpu_custom_call.1} parent=5 // pred_region
        %s117 = ssub.s32 %s11, 1
        // Predicated region
        $region13: #{tpu_custom_call.1} parent=11 // pred_check
          %p118 = pneg %p49
        $region14: #{tpu_custom_call.1} parent=11 // pred_check_branch
          %120 = sbr.rel (%p118) target = $region16
        $region15: #{tpu_custom_call.1} parent=11 // pred_region
          %s121 = smul.u32 16, %s20
          %p122 = scmp.lt.s32.totalorder %s121, 15
          %s123 = scalar_select %p122, %s121, 15
          %s124 = smul.addr %s123, 8
          %s125 = scalar_lea.vmem %s0, %s124
          %s126 = smul.u32 16, %s20
        $region16: #{tpu_custom_call.1} parent=11 // pred_fallthru
          _
      $region12: #{tpu_custom_call.1} parent=5 // pred_fallthru
        _
      %p127 = scmp.lt.s32.totalorder %s11, 3
      // Predicated region
      $region17: #{tpu_custom_call.1} parent=5 // pred_check
        %p128 = pneg %p127
      $region18: #{tpu_custom_call.1} parent=5 // pred_check_branch
        %130 = sbr.rel (%p128) target = $region20
      $region19: #{tpu_custom_call.1} parent=5 // pred_region
        // Predicated region
        $region21: #{tpu_custom_call.1} parent=19 // pred_check
          %p131 = pneg %p69
        $region22: #{tpu_custom_call.1} parent=19 // pred_check_branch
          %133 = sbr.rel (%p131) target = $region24
        $region23: #{tpu_custom_call.1} parent=19 // pred_region
          %p134 = scmp.lt.s32.totalorder %s19, 2
          %s135 = scalar_select %p134, %s19, 2
          %s136 = smul.addr %s135, 8
          %s137 = scalar_lea.vmem %s1, %s136
        $region24: #{tpu_custom_call.1} parent=19 // pred_fallthru
          _
      $region20: #{tpu_custom_call.1} parent=5 // pred_fallthru
        _
      %p138 = scmp.le.s32.totalorder 1, %s11
      %p139 = scmp.lt.s32.totalorder %s11, 4
      %p140 = pnand %p138, %p139
      %p141 = pneg %p140
      // Predicated region
      $region25: #{tpu_custom_call.1} parent=5 // pred_check
        _
      $region26: #{tpu_custom_call.1} parent=5 // pred_check_branch
        %143 = sbr.rel (%p140) target = $region28
      $region27: #{tpu_custom_call.1} parent=5 // pred_region
        %s144 = ssub.s32 %s11, 1
        %s145 = smul.u32 16, %s20
        %p146 = scmp.lt.s32.totalorder %s145, 15
        %s147 = scalar_select %p146, %s145, 15
        %s148 = smul.addr %s147, 8
        %s149 = scalar_lea.vmem %s0, %s148
        %p150 = pneg %p49
        %p151 = pneg %p46
        %p152 = scmp.lt.s32.totalorder %s21, 2
        %s153 = scalar_select %p152, %s21, 2
        %s154 = smul.addr %s153, 8
        %s155 = scalar_lea.vmem %s1, %s154
        %p156 = pneg %p75
        %p157 = pneg %p72
        %p158 = pneg %p103
        %p159 = pneg %p100
        %s160 = sand.u32 %s90, 1
        %s161 = scalar_lea.sflag [#allocation3], %s160
        %s162 = sand.u32 %s90, 1
        %s163 = smul.addr %s162, 64
        %s164 = scalar_lea.vmem [#allocation2], %s163
        %s165 = smul.u32 16, %s20
        %p166 = scmp.lt.s32.totalorder %s165, 15
        %s167 = scalar_select %p166, %s165, 15
        %s168 = smul.addr %s167, 8
        %s169 = scalar_lea.vmem %s0, %s168
        %s170 = smul.u32 16, %s20
        %p171 = scmp.lt.s32.totalorder %s21, 2
        %s172 = scalar_select %p171, %s21, 2
        %s173 = smul.addr %s172, 8
        %s174 = scalar_lea.vmem %s1, %s173
        %s175 = smul.u32 16, %s20
        %v176 = vld [vmem:[%s169] sm:$0xff]
        %v177 = vld [vmem:[%s169 + $0x8] sm:$0xff]
        %v178 = vld [vmem:[%s169 + $0x10] sm:$0xff]
        %v179 = vld [vmem:[%s169 + $0x18] sm:$0xff]
        %v180 = vld [vmem:[%s169 + $0x20] sm:$0xff]
        %v181 = vld [vmem:[%s169 + $0x28] sm:$0xff]
        %v182 = vld [vmem:[%s169 + $0x30] sm:$0xff]
        %v183 = vld [vmem:[%s169 + $0x38] sm:$0xff]
        %v184 = vld [vmem:[%s169 + $0x40] sm:$0xff]
        %v185 = vld [vmem:[%s169 + $0x48] sm:$0xff]
        %v186 = vld [vmem:[%s169 + $0x50] sm:$0xff]
        %v187 = vld [vmem:[%s169 + $0x58] sm:$0xff]
        %v188 = vld [vmem:[%s169 + $0x60] sm:$0xff]
        %v189 = vld [vmem:[%s169 + $0x68] sm:$0xff]
        %v190 = vld [vmem:[%s169 + $0x70] sm:$0xff]
        %v191 = vld [vmem:[%s169 + $0x78] sm:$0xff]
        %v192 = vld [vmem:[%s174] sm:$0xff]
        %vm193 = vcmask 64512
        %v195 = vsel %vm193, %v176, 0
        %v198 = vsel %vm193, %v177, 0
        %v201 = vsel %vm193, %v178, 0
        %v204 = vsel %vm193, %v179, 0
        %v207 = vsel %vm193, %v180, 0
        %v210 = vsel %vm193, %v181, 0
        %v213 = vsel %vm193, %v182, 0
        %v216 = vsel %vm193, %v183, 0
        %v219 = vsel %vm193, %v184, 0
        %v222 = vsel %vm193, %v185, 0
        %v225 = vsel %vm193, %v186, 0
        %v228 = vsel %vm193, %v187, 0
        %v231 = vsel %vm193, %v188, 0
        %v234 = vsel %vm193, %v189, 0
        %v237 = vsel %vm193, %v190, 0
        %v240 = vsel %vm193, %v191, 0
        %242 = vmatpush.msra.mxu0 0.0
        %243 = vmatpush.msra.mxu0 0.0
        %244 = vmatpush.msra.mxu0 0.0
        %245 = vmatpush.msra.mxu0 0.0
        %246 = vmatpush.msra.mxu0 0.0
        %247 = vmatpush.msra.mxu0 0.0
        %248 = vmatpush.msra.mxu0 0.0
        %249 = vmatpush.msra.mxu0 0.0
        %250 = vmatpush.msra.mxu0 0.0
        %251 = vmatpush.msra.mxu0 0.0
        %252 = vmatpush.msra.mxu0 0.0
        %253 = vmatpush.msra.mxu0 0.0
        %254 = vmatpush.msra.mxu0 0.0
        %255 = vmatpush.msra.mxu0 0.0
        %256 = vmatpush.msra.mxu0 0.0
        %257 = vmatpush.msra.mxu0 %v192
        %258 = vmatmul.f32.gmra.mxu0 %v195
        %v259 = vpop.f32.mrf.mxu0
        %v260 = vadd.f32 0.0, %v259
        %261 = vmatmul.f32.gmra.mxu0 %v198
        %v262 = vpop.f32.mrf.mxu0
        %v263 = vadd.f32 0.0, %v262
        %264 = vmatmul.f32.gmra.mxu0 %v201
        %v265 = vpop.f32.mrf.mxu0
        %v266 = vadd.f32 0.0, %v265
        %267 = vmatmul.f32.gmra.mxu0 %v204
        %v268 = vpop.f32.mrf.mxu0
        %v269 = vadd.f32 0.0, %v268
        %270 = vmatmul.f32.gmra.mxu0 %v207
        %v271 = vpop.f32.mrf.mxu0
        %v272 = vadd.f32 0.0, %v271
        %273 = vmatmul.f32.gmra.mxu0 %v210
        %v274 = vpop.f32.mrf.mxu0
        %v275 = vadd.f32 0.0, %v274
        %276 = vmatmul.f32.gmra.mxu0 %v213
        %v277 = vpop.f32.mrf.mxu0
        %v278 = vadd.f32 0.0, %v277
        %279 = vmatmul.f32.gmra.mxu0 %v216
        %v280 = vpop.f32.mrf.mxu0
        %v281 = vadd.f32 0.0, %v280
        %282 = vmatmul.f32.gmra.mxu0 %v219
        %v283 = vpop.f32.mrf.mxu0
        %v284 = vadd.f32 0.0, %v283
        %285 = vmatmul.f32.gmra.mxu0 %v222
        %v286 = vpop.f32.mrf.mxu0
        %v287 = vadd.f32 0.0, %v286
        %288 = vmatmul.f32.gmra.mxu0 %v225
        %v289 = vpop.f32.mrf.mxu0
        %v290 = vadd.f32 0.0, %v289
        %291 = vmatmul.f32.gmra.mxu0 %v228
        %v292 = vpop.f32.mrf.mxu0
        %v293 = vadd.f32 0.0, %v292
        %294 = vmatmul.f32.gmra.mxu0 %v231
        %v295 = vpop.f32.mrf.mxu0
        %v296 = vadd.f32 0.0, %v295
        %297 = vmatmul.f32.gmra.mxu0 %v234
        %v298 = vpop.f32.mrf.mxu0
        %v299 = vadd.f32 0.0, %v298
        %300 = vmatmul.f32.gmra.mxu0 %v237
        %v301 = vpop.f32.mrf.mxu0
        %v302 = vadd.f32 0.0, %v301
        %303 = vmatmul.f32.gmra.mxu0 %v240
        %v304 = vpop.f32.mrf.mxu0
        %v305 = vadd.f32 0.0, %v304
        %306 = vdwg.mxu0
        %v307 = vpack.c.bf16 %v260, %v260
        %v308 = vpack.c.bf16 %v263, %v263
        %v309 = vpack.c.bf16 %v266, %v266
        %v310 = vpack.c.bf16 %v269, %v269
        %v311 = vpack.c.bf16 %v272, %v272
        %v312 = vpack.c.bf16 %v275, %v275
        %v313 = vpack.c.bf16 %v278, %v278
        %v314 = vpack.c.bf16 %v281, %v281
        %v315 = vpack.c.bf16 %v284, %v284
        %v316 = vpack.c.bf16 %v287, %v287
        %v317 = vpack.c.bf16 %v290, %v290
        %v318 = vpack.c.bf16 %v293, %v293
        %v319 = vpack.c.bf16 %v296, %v296
        %v320 = vpack.c.bf16 %v299, %v299
        %v321 = vpack.c.bf16 %v302, %v302
        %v322 = vpack.c.bf16 %v305, %v305
        %323 = vst [vmem:[%s164] sm:$0xf] %v307
        %324 = vst [vmem:[%s164 + $0x4] sm:$0xf] %v308
        %325 = vst [vmem:[%s164 + $0x8] sm:$0xf] %v309
        %326 = vst [vmem:[%s164 + $0xc] sm:$0xf] %v310
        %327 = vst [vmem:[%s164 + $0x10] sm:$0xf] %v311
        %328 = vst [vmem:[%s164 + $0x14] sm:$0xf] %v312
        %329 = vst [vmem:[%s164 + $0x18] sm:$0xf] %v313
        %330 = vst [vmem:[%s164 + $0x1c] sm:$0xf] %v314
        %331 = vst [vmem:[%s164 + $0x20] sm:$0xf] %v315
        %332 = vst [vmem:[%s164 + $0x24] sm:$0xf] %v316
        %333 = vst [vmem:[%s164 + $0x28] sm:$0xf] %v317
        %334 = vst [vmem:[%s164 + $0x2c] sm:$0xf] %v318
        %335 = vst [vmem:[%s164 + $0x30] sm:$0xf] %v319
        %336 = vst [vmem:[%s164 + $0x34] sm:$0xf] %v320
        %337 = vst [vmem:[%s164 + $0x38] sm:$0xf] %v321
        %338 = vst [vmem:[%s164 + $0x3c] sm:$0xf] %v322
        %s339 = sand.u32 %s90, 1
        %s340 = scalar_lea.sflag [#allocation3], %s339
        %s341 = sand.u32 %s90, 1
        %s342 = smul.addr %s341, 64
        %s343 = scalar_lea.vmem [#allocation2], %s342
        // Predicated region
        $region29: #{tpu_custom_call.1} parent=27 // pred_check
          %p344 = pneg %p100
        $region30: #{tpu_custom_call.1} parent=27 // pred_check_branch
          %346 = sbr.rel (%p344) target = $region32
        $region31: #{tpu_custom_call.1} parent=27 // pred_region
          %s347 = smul.u32 16, %s20
          %349 = vsyncadd %s340, 0
          %s350 = smul.addr %s21, 16
          %s351 = sadd.s32 %s347, %s350
          %s352 = smul.addr %s351, 4
          %s353 = scalar_lea.hbm %s2, %s352
          %s354 = sshll.u32 %s343, 4
          %s355 = int_to_ptr.vmem [resolvable:$true] %s354
          %s356 = sshll.u32 %s353, 4
          %s357 = int_to_ptr.hbm [resolvable:$true] %s356
          %362 = dma.vmem_to_hbm [thread:$0]  %s355, 1024, %s357, %s340, 64, 64, 4
        $region32: #{tpu_custom_call.1} parent=27 // pred_fallthru
          _
      $region28: #{tpu_custom_call.1} parent=5 // pred_fallthru
        _
      %p363 = scmp.le.s32.totalorder 2, %s11
      // Predicated region
      $region33: #{tpu_custom_call.1} parent=5 // pred_check
        %p364 = pneg %p363
      $region34: #{tpu_custom_call.1} parent=5 // pred_check_branch
        %366 = sbr.rel (%p364) target = $region36
      $region35: #{tpu_custom_call.1} parent=5 // pred_region
        %s367 = ssub.s32 %s11, 2
        // Predicated region
        $region37: #{tpu_custom_call.1} parent=35 // pred_check
          %p368 = pneg %p106
        $region38: #{tpu_custom_call.1} parent=35 // pred_check_branch
          %370 = sbr.rel (%p368) target = $region40
        $region39: #{tpu_custom_call.1} parent=35 // pred_region
          %s371 = sand.u32 %s91, 1
          %s372 = scalar_lea.sflag [#allocation3], %s371
          %s373 = sand.u32 %s91, 1
          %s374 = smul.addr %s373, 64
          %s375 = scalar_lea.vmem [#allocation2], %s374
          %377 = dma.done %s372, 1024
        $region40: #{tpu_custom_call.1} parent=35 // pred_fallthru
          _
      $region36: #{tpu_custom_call.1} parent=5 // pred_fallthru
        _
    $region6: #{tpu_custom_call.1} parent=1 // loop_footer
      %s15 = sadd.s32 1, %s11
    $region7: #{tpu_custom_call.1} parent=1 // loop_footer_branch
      %10 = sbr.rel target = $region3
    $region8: #{tpu_custom_call.1} parent=1 // loop_exit
      _
    %378 = vsyncpa [#allocation3], 1
    %s379 = scalar_lea.sflag [#allocation3], 1
    %380 = vsyncpa %s379, 1

</llo_original>
